<compile_context>
chip_gen: v6e
topology: v6e:2x2x1
jax: 0.10.0
libtpu: 0.0.40
codegen_flags: <defaults>
</compile_context>

<pallas_src>
import functools

import jax
import jax.numpy as jnp
from jax import lax
from jax.experimental import pallas as pl
from jax.experimental.pallas import tpu as pltpu


LEAKY = 0.1           # matches Critic(leaky=0.1) default in the PyTorch spec
LANE = 128
MAX_BATCH_TILE = 1024  # rows of x per grid step (multiple of 128); fits easily in VMEM
                       # on all of v5e/v6e/v7x (x tile: 1024*256*2B = 512 KiB, x2 buffers)


def _round_up(n, m):
    return ((n + m - 1) // m) * m


def _leaky_relu(x, slope):
    return jnp.where(x > 0, x, slope * x)


# ---------------------------------------------------------------------------
# Kernel
# ---------------------------------------------------------------------------

def critic_kernel(x_ref, w1_ref, b1_ref, w2_ref, b2_ref, w3_ref, b3_ref, o_ref):
    # fc1: (TB, IN) @ (IN, F1) on the MXU (bf16 inputs, f32 accumulate).
    h = jnp.dot(x_ref[...], w1_ref[...], preferred_element_type=jnp.float32)
    h = _leaky_relu(h + b1_ref[...], LEAKY)

    # fc2: (TB, F1) @ (F1, F2).
    h = jnp.dot(h.astype(jnp.bfloat16), w2_ref[...],
                preferred_element_type=jnp.float32)
    h = _leaky_relu(h + b2_ref[...], LEAKY)

    # fc3: contract the feature axis of h against the single w3 row. Result is a
    # lane-dense (1, TB) row (batch on lanes): avoids the degenerate N=1 matmul of
    # the naive layout and the masked (TB, 1) partial stores on writeback.
    out_row = lax.dot_general(
        w3_ref[...], h.astype(jnp.bfloat16),
        dimension_numbers=(((1,), (1,)), ((), ())),
        preferred_element_type=jnp.float32)
    o_ref[...] = out_row + b3_ref[...]


# ---------------------------------------------------------------------------
# Wrapper
# ---------------------------------------------------------------------------

@functools.partial(jax.jit, static_argnames=("batch_tile",))
def critic_forward(x, params, batch_tile=MAX_BATCH_TILE):
    """x: (B, in_features). params: prepared (padded, bf16) weights from init_params."""
    B, in_features = x.shape
    in_pad = params["w1"].shape[0]
    f1_pad = params["w1"].shape[1]
    f2_pad = params["w2"].shape[1]

    # Batch tile: multiple of 128 lanes so the (1, TB) output block is lane-dense.
    tb = min(batch_tile, _round_up(B, LANE))
    b_pad = _round_up(B, tb)
    num_tiles = b_pad // tb

    # bf16 matmul inputs (halves HBM bytes for x when the caller keeps x in bf16
    # upstream); zero-pad batch/feature dims to tile boundaries (no-op if aligned).
    xb = x.astype(jnp.bfloat16)
    xb = jnp.pad(xb, ((0, b_pad - B), (0, in_pad - in_features)))

    out_row = pl.pallas_call(
        critic_kernel,
        out_shape=jax.ShapeDtypeStruct((1, b_pad), jnp.float32),
        grid=(num_tiles,),
        in_specs=[
            # x: streamed per batch tile (double-buffered by the Pallas pipeline).
            pl.BlockSpec((tb, in_pad), lambda i: (i, 0)),
            # Weights / biases: constant block index -> stay resident in VMEM.
            pl.BlockSpec((in_pad, f1_pad), lambda i: (0, 0)),
            pl.BlockSpec((1, f1_pad), lambda i: (0, 0)),
            pl.BlockSpec((f1_pad, f2_pad), lambda i: (0, 0)),
            pl.BlockSpec((1, f2_pad), lambda i: (0, 0)),
            pl.BlockSpec((1, f2_pad), lambda i: (0, 0)),
            pl.BlockSpec((1, 1), lambda i: (0, 0)),
        ],
        out_specs=pl.BlockSpec((1, tb), lambda i: (0, i)),
        compiler_params=pltpu.CompilerParams(
            dimension_semantics=("parallel",),   # shards tiles across TCs on v7x
        ),
    )(xb, params["w1"], params["b1"], params["w2"], params["b2"],
      params["w3"], params["b3"])

    # Back to the module's (B, 1) column output.
    return out_row[0, :B].reshape(B, 1)


# ---------------------------------------------------------------------------
# Parameter setup (plain JAX glue): spectral normalization + layout prep
# ---------------------------------------------------------------------------

def _l2_normalize(v, eps=1e-12):
    return v / (jnp.linalg.norm(v) + eps)


def spectral_normalize(w_out_in, u):
    """One power-iteration step (matches torch.nn.utils.spectral_norm forward)."""
    v = _l2_normalize(w_out_in.T @ u)      # (in,)
    u_new = _l2_normalize(w_out_in @ v)    # (out,)
    sigma = u_new @ (w_out_in @ v)
    return w_out_in / sigma


def prepare_params(w1, b1, w2, b2, w3, b3):
    """Transpose to (in, out), zero-pad dims to 128 lanes, cast weights to bf16.

    Done once, outside the per-forward hot path.
    """
    in_features, f1, f2 = w1.shape[1], w1.shape[0], w2.shape[0]
    in_pad = max(LANE, _round_up(in_features, LANE))
    f1_pad = max(LANE, _round_up(f1, LANE))
    f2_pad = max(LANE, _round_up(f2, LANE))

    def pack_w(w_out_in, rows_pad, cols_pad):
        wt = w_out_in.T                              # (in, out) for x @ W on the MXU
        wt = jnp.pad(wt, ((0, rows_pad - wt.shape[0]), (0, cols_pad - wt.shape[1])))
        return wt.astype(jnp.bfloat16)

    def pack_b(b, cols_pad):
        return jnp.pad(b, (0, cols_pad - b.shape[0]))[None, :].astype(jnp.float32)

    return {
        "w1": pack_w(w1, in_pad, f1_pad), "b1": pack_b(b1, f1_pad),
        "w2": pack_w(w2, f1_pad, f2_pad), "b2": pack_b(b2, f2_pad),
        # fc3 weight kept as a single (1, f2_pad) row; contracted in-kernel against
        # h2's feature axis to produce the lane-dense (1, TB) output.
        "w3": jnp.pad(w3, ((0, 0), (0, f2_pad - f2))).astype(jnp.bfloat16),
        "b3": b3.reshape(1, 1).astype(jnp.float32),
    }


def init_params(key, in_features):
    f1, f2 = in_features // 2, in_features // 4
    keys = jax.random.split(key, 9)

    def linear_init(kw, kb, fan_in, fan_out):
        bound = 1.0 / jnp.sqrt(fan_in)
        w = jax.random.uniform(kw, (fan_out, fan_in), jnp.float32, -bound, bound)
        b = jax.random.uniform(kb, (fan_out,), jnp.float32, -bound, bound)
        return w, b

    w1, b1 = linear_init(keys[0], keys[1], in_features, f1)
    w2, b2 = linear_init(keys[2], keys[3], f1, f2)
    w3, b3 = linear_init(keys[4], keys[5], f2, 1)

    u1 = _l2_normalize(jax.random.normal(keys[6], (f1,), jnp.float32))
    u2 = _l2_normalize(jax.random.normal(keys[7], (f2,), jnp.float32))
    u3 = _l2_normalize(jax.random.normal(keys[8], (1,), jnp.float32))

    w1 = spectral_normalize(w1, u1)
    w2 = spectral_normalize(w2, u2)
    w3 = spectral_normalize(w3, u3)

    return prepare_params(w1, b1, w2, b2, w3, b3)


def critic_reference(x, params):
    """Pure-JAX reference of the same forward (mirrors the kernel's bf16 casts)."""
    f32 = jnp.float32
    in_pad = params["w1"].shape[0]
    xb = jnp.pad(x, ((0, 0), (0, in_pad - x.shape[1])))
    xb = xb.astype(jnp.bfloat16).astype(f32)
    w1 = params["w1"].astype(f32)
    w2 = params["w2"].astype(f32)
    w3 = params["w3"].astype(f32)
    h = _leaky_relu(xb @ w1 + params["b1"], LEAKY)
    h = _leaky_relu(h.astype(jnp.bfloat16).astype(f32) @ w2 + params["b2"], LEAKY)
    return h.astype(jnp.bfloat16).astype(f32) @ w3.T + params["b3"]


if __name__ == "__main__":
    IN_FEATURES = 256   # PyTorch Critic default (fc: 256 -> 128 -> 64 -> 1)
    BATCH = 64

    key = jax.random.PRNGKey(0)
    k_params, k_x = jax.random.split(key)

    params = init_params(k_params, IN_FEATURES)
    x = jax.random.normal(k_x, (BATCH, IN_FEATURES), jnp.float32)

    out = jax.block_until_ready(critic_forward(x, params))
    ref = critic_reference(x, params)

    assert out.shape == (BATCH, 1)
    assert jnp.allclose(out, ref, atol=2e-2, rtol=2e-2), "mismatch vs JAX reference"

    print("KERNEL_OK")
</pallas_src>

<mosaic_0001>
module attributes {stable_mosaic.version = 11 : i64} {
  func.func @critic_kernel(%arg0: i32, %arg1: memref<128x256xbf16, #tpu.memory_space<vmem>>, %arg2: memref<256x128xbf16, #tpu.memory_space<vmem>>, %arg3: memref<1x128xf32, #tpu.memory_space<vmem>>, %arg4: memref<128x128xbf16, #tpu.memory_space<vmem>>, %arg5: memref<1x128xf32, #tpu.memory_space<vmem>>, %arg6: memref<1x128xbf16, #tpu.memory_space<vmem>>, %arg7: memref<1x1xf32, #tpu.memory_space<vmem>>, %arg8: memref<1x128xf32, #tpu.memory_space<vmem>>) attributes {dimension_semantics = [#tpu.dimension_semantics<parallel>], iteration_bounds = array<i64: 1>, scalar_prefetch = 0 : i64, scratch_operands = 0 : i64, tpu.core_type = #tpu.core_type<tc>, window_params = [{transform_indices = @transform_0, window_bounds = array<i64: 128, 256>}, {pipeline_mode = #tpu.pipeline_mode<synchronous>, transform_indices = @transform_1, window_bounds = array<i64: 256, 128>}, {pipeline_mode = #tpu.pipeline_mode<synchronous>, transform_indices = @transform_2, window_bounds = array<i64: 1, 128>}, {pipeline_mode = #tpu.pipeline_mode<synchronous>, transform_indices = @transform_3, window_bounds = array<i64: 128, 128>}, {pipeline_mode = #tpu.pipeline_mode<synchronous>, transform_indices = @transform_4, window_bounds = array<i64: 1, 128>}, {pipeline_mode = #tpu.pipeline_mode<synchronous>, transform_indices = @transform_5, window_bounds = array<i64: 1, 128>}, {pipeline_mode = #tpu.pipeline_mode<synchronous>, transform_indices = @transform_6, window_bounds = array<i64: 1, 1>}, {transform_indices = @transform_7, window_bounds = array<i64: 1, 128>}]} {
    %c0 = arith.constant 0 : index
    %c0_0 = arith.constant 0 : index
    %0 = vector.load %arg1[%c0, %c0_0] : memref<128x256xbf16, #tpu.memory_space<vmem>>, vector<128x256xbf16>
    %c0_1 = arith.constant 0 : index
    %c0_2 = arith.constant 0 : index
    %1 = vector.load %arg2[%c0_1, %c0_2] : memref<256x128xbf16, #tpu.memory_space<vmem>>, vector<256x128xbf16>
    %cst = arith.constant dense<0.000000e+00> : vector<128x128xf32>
    %2 = tpu.matmul %0, %1, %cst {dimension_numbers = #tpu.dot_dimension_numbers<[1], [0], [0], [1], [0, 0, 1, 1], [], []>} : vector<128x256xbf16>, vector<256x128xbf16>, vector<128x128xf32> -> vector<128x128xf32>
    %c0_3 = arith.constant 0 : index
    %c0_4 = arith.constant 0 : index
    %3 = vector.load %arg3[%c0_3, %c0_4] : memref<1x128xf32, #tpu.memory_space<vmem>>, vector<1x128xf32>
    %4 = vector.broadcast %3 : vector<1x128xf32> to vector<128x128xf32>
    %5 = arith.addf %2, %4 : vector<128x128xf32>
    %cst_5 = arith.constant 0.000000e+00 : f32
    %6 = vector.broadcast %cst_5 : f32 to vector<128x128xf32>
    %7 = arith.cmpf ogt, %5, %6 : vector<128x128xf32>
    %cst_6 = arith.constant 1.000000e-01 : f32
    %8 = vector.broadcast %cst_6 : f32 to vector<128x128xf32>
    %9 = arith.mulf %8, %5 : vector<128x128xf32>
    %10 = arith.select %7, %5, %9 : vector<128x128xi1>, vector<128x128xf32>
    %11 = arith.truncf %10 : vector<128x128xf32> to vector<128x128xbf16>
    %c0_7 = arith.constant 0 : index
    %c0_8 = arith.constant 0 : index
    %12 = vector.load %arg4[%c0_7, %c0_8] : memref<128x128xbf16, #tpu.memory_space<vmem>>, vector<128x128xbf16>
    %cst_9 = arith.constant dense<0.000000e+00> : vector<128x128xf32>
    %13 = tpu.matmul %11, %12, %cst_9 {dimension_numbers = #tpu.dot_dimension_numbers<[1], [0], [0], [1], [0, 0, 1, 1], [], []>} : vector<128x128xbf16>, vector<128x128xbf16>, vector<128x128xf32> -> vector<128x128xf32>
    %c0_10 = arith.constant 0 : index
    %c0_11 = arith.constant 0 : index
    %14 = vector.load %arg5[%c0_10, %c0_11] : memref<1x128xf32, #tpu.memory_space<vmem>>, vector<1x128xf32>
    %15 = vector.broadcast %14 : vector<1x128xf32> to vector<128x128xf32>
    %16 = arith.addf %13, %15 : vector<128x128xf32>
    %cst_12 = arith.constant 0.000000e+00 : f32
    %17 = vector.broadcast %cst_12 : f32 to vector<128x128xf32>
    %18 = arith.cmpf ogt, %16, %17 : vector<128x128xf32>
    %cst_13 = arith.constant 1.000000e-01 : f32
    %19 = vector.broadcast %cst_13 : f32 to vector<128x128xf32>
    %20 = arith.mulf %19, %16 : vector<128x128xf32>
    %21 = arith.select %18, %16, %20 : vector<128x128xi1>, vector<128x128xf32>
    %c0_14 = arith.constant 0 : index
    %c0_15 = arith.constant 0 : index
    %22 = vector.load %arg6[%c0_14, %c0_15] : memref<1x128xbf16, #tpu.memory_space<vmem>>, vector<1x128xbf16>
    %23 = arith.truncf %21 : vector<128x128xf32> to vector<128x128xbf16>
    %cst_16 = arith.constant dense<0.000000e+00> : vector<1x128xf32>
    %24 = tpu.matmul %22, %23, %cst_16 {dimension_numbers = #tpu.dot_dimension_numbers<[1], [1], [0], [0], [0, 0, 1, 0], [], []>} : vector<1x128xbf16>, vector<128x128xbf16>, vector<1x128xf32> -> vector<1x128xf32>
    %c0_17 = arith.constant 0 : index
    %c0_18 = arith.constant 0 : index
    %25 = vector.load %arg7[%c0_17, %c0_18] : memref<1x1xf32, #tpu.memory_space<vmem>>, vector<1x1xf32>
    %26 = vector.broadcast %25 : vector<1x1xf32> to vector<1x128xf32>
    %27 = arith.addf %24, %26 : vector<1x128xf32>
    %c0_19 = arith.constant 0 : index
    %c0_20 = arith.constant 0 : index
    %28 = vector.load %arg8[%c0_19, %c0_20] : memref<1x128xf32, #tpu.memory_space<vmem>>, vector<1x128xf32>
    tpu.vector_store %arg8[%c0_19, %c0_20], %27 {strides = array<i32>} : memref<1x128xf32, #tpu.memory_space<vmem>>, vector<1x128xf32>,
    return
  }
  func.func @transform_0(%arg0: i32) -> (i32, i32) {
    %c0_i32 = arith.constant 0 : i32
    %c0_i32_0 = arith.constant 0 : i32
    return %arg0, %c0_i32 : i32, i32
  }
  func.func @transform_1(%arg0: i32) -> (i32, i32) {
    %c0_i32 = arith.constant 0 : i32
    %c0_i32_0 = arith.constant 0 : i32
    %c0_i32_1 = arith.constant 0 : i32
    return %c0_i32, %c0_i32_0 : i32, i32
  }
  func.func @transform_2(%arg0: i32) -> (i32, i32) {
    %c0_i32 = arith.constant 0 : i32
    %c0_i32_0 = arith.constant 0 : i32
    %c0_i32_1 = arith.constant 0 : i32
    return %c0_i32, %c0_i32_0 : i32, i32
  }
  func.func @transform_3(%arg0: i32) -> (i32, i32) {
    %c0_i32 = arith.constant 0 : i32
    %c0_i32_0 = arith.constant 0 : i32
    %c0_i32_1 = arith.constant 0 : i32
    return %c0_i32, %c0_i32_0 : i32, i32
  }
  func.func @transform_4(%arg0: i32) -> (i32, i32) {
    %c0_i32 = arith.constant 0 : i32
    %c0_i32_0 = arith.constant 0 : i32
    %c0_i32_1 = arith.constant 0 : i32
    return %c0_i32, %c0_i32_0 : i32, i32
  }
  func.func @transform_5(%arg0: i32) -> (i32, i32) {
    %c0_i32 = arith.constant 0 : i32
    %c0_i32_0 = arith.constant 0 : i32
    %c0_i32_1 = arith.constant 0 : i32
    return %c0_i32, %c0_i32_0 : i32, i32
  }
  func.func @transform_6(%arg0: i32) -> (i32, i32) {
    %c0_i32 = arith.constant 0 : i32
    %c0_i32_0 = arith.constant 0 : i32
    %c0_i32_1 = arith.constant 0 : i32
    return %c0_i32, %c0_i32_0 : i32, i32
  }
  func.func @transform_7(%arg0: i32) -> (i32, i32) {
    %c0_i32 = arith.constant 0 : i32
    %c0_i32_0 = arith.constant 0 : i32
    return %c0_i32, %arg0 : i32, i32
  }
}

</mosaic_0001>

<llo_original>
// kernel: critic_forward.1
$region0: #{critic_forward.1}
  #allocation0 [shape = 'u32[]', space=smem, size = 0x4, offset = 0x4, fixed_abs, tag = 'smem constant byte address 0x4 - core index']
  #allocation1 [shape = 'u32[144,128]{1,0:T(1,128)}', space=vmem, size = 0x12000, scoped, tag = 'internal scratch']
  #allocation2 [shape = 'f32[1,1]{1,0:T(1,128)S(1)}', space=vmem, size = 0x200, scoped, tag = 'scoped memory for critic_forward.1']
  %s0 = inlined_call_operand.vmem [shape: bf16[128,256], index: 0, kind: input, shape index: {}]
  %s1 = inlined_call_operand.vmem [shape: bf16[256,128], index: 1, kind: input, shape index: {}]
  %s2 = inlined_call_operand.vmem [shape: f32[1,128], index: 2, kind: input, shape index: {}]
  %s3 = inlined_call_operand.vmem [shape: bf16[128,128], index: 3, kind: input, shape index: {}]
  %s4 = inlined_call_operand.vmem [shape: f32[1,128], index: 4, kind: input, shape index: {}]
  %s5 = inlined_call_operand.vmem [shape: bf16[1,128], index: 5, kind: input, shape index: {}]
  %s6 = inlined_call_operand.<no memory space> [shape: f32[1,1], index: 6, kind: input, shape index: {}]
  %s7 = inlined_call_operand.vmem [shape: f32[1,128], index: 7, kind: output, shape index: {}]
  %s8 = sld [smem:[#allocation0]]
  $region38: #{critic_forward.1} parent=0
    _
  %s10 = ssub.s32 1, %s8
  %s11 = scalar_select 0, %s10, %s8
  %v12 = vstv %s6
  %13 = vst [vmem:[#allocation2] sm:$0x1] %v12
  // Predicated region
  $region2: #{critic_forward.1} parent=0 // pred_check
    _
  $region3: #{critic_forward.1} parent=0 // pred_check_branch
    %15 = sbr.rel (0) target = $region5
  $region4: #{critic_forward.1} parent=0 // pred_region
    _
  $region5: #{critic_forward.1} parent=0 // pred_fallthru
    _
  // Predicated region
  $region6: #{critic_forward.1} parent=0 // pred_check
    _
  $region7: #{critic_forward.1} parent=0 // pred_check_branch
    %17 = sbr.rel (0) target = $region9
  $region8: #{critic_forward.1} parent=0 // pred_region
    _
  $region9: #{critic_forward.1} parent=0 // pred_fallthru
    _
  // Predicated region
  $region10: #{critic_forward.1} parent=0 // pred_check
    _
  $region11: #{critic_forward.1} parent=0 // pred_check_branch
    %19 = sbr.rel (0) target = $region13
  $region12: #{critic_forward.1} parent=0 // pred_region
    _
  $region13: #{critic_forward.1} parent=0 // pred_fallthru
    _
  // Predicated region
  $region14: #{critic_forward.1} parent=0 // pred_check
    _
  $region15: #{critic_forward.1} parent=0 // pred_check_branch
    %21 = sbr.rel (0) target = $region17
  $region16: #{critic_forward.1} parent=0 // pred_region
    _
  $region17: #{critic_forward.1} parent=0 // pred_fallthru
    _
  // Predicated region
  $region18: #{critic_forward.1} parent=0 // pred_check
    _
  $region19: #{critic_forward.1} parent=0 // pred_check_branch
    %23 = sbr.rel (0) target = $region21
  $region20: #{critic_forward.1} parent=0 // pred_region
    _
  $region21: #{critic_forward.1} parent=0 // pred_fallthru
    _
  // Predicated region
  $region22: #{critic_forward.1} parent=0 // pred_check
    _
  $region23: #{critic_forward.1} parent=0 // pred_check_branch
    %25 = sbr.rel (0) target = $region25
  $region24: #{critic_forward.1} parent=0 // pred_region
    _
  $region25: #{critic_forward.1} parent=0 // pred_fallthru
    _
  // Predicated region
  $region26: #{critic_forward.1} parent=0 // pred_check
    _
  $region27: #{critic_forward.1} parent=0 // pred_check_branch
    %27 = sbr.rel (0) target = $region29
  $region28: #{critic_forward.1} parent=0 // pred_region
    _
  $region29: #{critic_forward.1} parent=0 // pred_fallthru
    _
  %v29 = vld [vmem:[%s0] sm:$0xff]
  %v30 = vld [vmem:[%s0 + $0x8] sm:$0xff]
  %v31 = vld [vmem:[%s0 + $0x10] sm:$0xff]
  %v32 = vld [vmem:[%s0 + $0x18] sm:$0xff]
  %v33 = vld [vmem:[%s0 + $0x20] sm:$0xff]
  %v34 = vld [vmem:[%s0 + $0x28] sm:$0xff]
  %v35 = vld [vmem:[%s0 + $0x30] sm:$0xff]
  %v36 = vld [vmem:[%s0 + $0x38] sm:$0xff]
  %v37 = vld [vmem:[%s0 + $0x40] sm:$0xff]
  %v38 = vld [vmem:[%s0 + $0x48] sm:$0xff]
  %v39 = vld [vmem:[%s0 + $0x50] sm:$0xff]
  %v40 = vld [vmem:[%s0 + $0x58] sm:$0xff]
  %v41 = vld [vmem:[%s0 + $0x60] sm:$0xff]
  %v42 = vld [vmem:[%s0 + $0x68] sm:$0xff]
  %v43 = vld [vmem:[%s0 + $0x70] sm:$0xff]
  %v44 = vld [vmem:[%s0 + $0x78] sm:$0xff]
  %v45 = vld [vmem:[%s1] sm:$0xf]
  %v46 = vld [vmem:[%s1 + $0x4] sm:$0xf]
  %v47 = vld [vmem:[%s1 + $0x8] sm:$0xf]
  %v48 = vld [vmem:[%s1 + $0xc] sm:$0xf]
  %v49 = vld [vmem:[%s1 + $0x10] sm:$0xf]
  %v50 = vld [vmem:[%s1 + $0x14] sm:$0xf]
  %v51 = vld [vmem:[%s1 + $0x18] sm:$0xf]
  %v52 = vld [vmem:[%s1 + $0x1c] sm:$0xf]
  %v53 = vld [vmem:[%s1 + $0x20] sm:$0xf]
  %v54 = vld [vmem:[%s1 + $0x24] sm:$0xf]
  %v55 = vld [vmem:[%s1 + $0x28] sm:$0xf]
  %v56 = vld [vmem:[%s1 + $0x2c] sm:$0xf]
  %v57 = vld [vmem:[%s1 + $0x30] sm:$0xf]
  %v58 = vld [vmem:[%s1 + $0x34] sm:$0xf]
  %v59 = vld [vmem:[%s1 + $0x38] sm:$0xf]
  %v60 = vld [vmem:[%s1 + $0x3c] sm:$0xf]
  %v61 = vld [vmem:[%s1 + $0x40] sm:$0xf]
  %v62 = vld [vmem:[%s1 + $0x44] sm:$0xf]
  %v63 = vld [vmem:[%s1 + $0x48] sm:$0xf]
  %v64 = vld [vmem:[%s1 + $0x4c] sm:$0xf]
  %v65 = vld [vmem:[%s1 + $0x50] sm:$0xf]
  %v66 = vld [vmem:[%s1 + $0x54] sm:$0xf]
  %v67 = vld [vmem:[%s1 + $0x58] sm:$0xf]
  %v68 = vld [vmem:[%s1 + $0x5c] sm:$0xf]
  %v69 = vld [vmem:[%s1 + $0x60] sm:$0xf]
  %v70 = vld [vmem:[%s1 + $0x64] sm:$0xf]
  %v71 = vld [vmem:[%s1 + $0x68] sm:$0xf]
  %v72 = vld [vmem:[%s1 + $0x6c] sm:$0xf]
  %v73 = vld [vmem:[%s1 + $0x70] sm:$0xf]
  %v74 = vld [vmem:[%s1 + $0x74] sm:$0xf]
  %v75 = vld [vmem:[%s1 + $0x78] sm:$0xf]
  %v76 = vld [vmem:[%s1 + $0x7c] sm:$0xf]
  %v77 = vld [vmem:[%s2] sm:$0x1]
  %v79 = vlaneseq
  %v80 = vshrl.u32 %v79, 7
  %v81 = vsub.s32 0, %v80
  %v82 = vrot.slane %v77, %v81
  %v100 = vunpack.c.l.b16 %v29
  %v101 = vunpack.c.h.b16 %v29
  %v102 = vunpack.c.l.b16 %v30
  %v103 = vunpack.c.h.b16 %v30
  %v104 = vunpack.c.l.b16 %v31
  %v105 = vunpack.c.h.b16 %v31
  %v106 = vunpack.c.l.b16 %v32
  %v107 = vunpack.c.h.b16 %v32
  %v108 = vunpack.c.l.b16 %v33
  %v109 = vunpack.c.h.b16 %v33
  %v110 = vunpack.c.l.b16 %v34
  %v111 = vunpack.c.h.b16 %v34
  %v112 = vunpack.c.l.b16 %v35
  %v113 = vunpack.c.h.b16 %v35
  %v114 = vunpack.c.l.b16 %v36
  %v115 = vunpack.c.h.b16 %v36
  %v116 = vunpack.c.l.b16 %v37
  %v117 = vunpack.c.h.b16 %v37
  %v118 = vunpack.c.l.b16 %v38
  %v119 = vunpack.c.h.b16 %v38
  %v120 = vunpack.c.l.b16 %v39
  %v121 = vunpack.c.h.b16 %v39
  %v122 = vunpack.c.l.b16 %v40
  %v123 = vunpack.c.h.b16 %v40
  %v124 = vunpack.c.l.b16 %v41
  %v125 = vunpack.c.h.b16 %v41
  %v126 = vunpack.c.l.b16 %v42
  %v127 = vunpack.c.h.b16 %v42
  %v128 = vunpack.c.l.b16 %v43
  %v129 = vunpack.c.h.b16 %v43
  %v130 = vunpack.c.l.b16 %v44
  %v131 = vunpack.c.h.b16 %v44
  %v132 = vpack.c.b16 %v102, %v100
  %v133 = vpack.c.b16 %v103, %v101
  %v134 = vpack.c.b16 %v106, %v104
  %v135 = vpack.c.b16 %v107, %v105
  %v136 = vpack.c.b16 %v110, %v108
  %v137 = vpack.c.b16 %v111, %v109
  %v138 = vpack.c.b16 %v114, %v112
  %v139 = vpack.c.b16 %v115, %v113
  %v140 = vpack.c.b16 %v118, %v116
  %v141 = vpack.c.b16 %v119, %v117
  %v142 = vpack.c.b16 %v122, %v120
  %v143 = vpack.c.b16 %v123, %v121
  %v144 = vpack.c.b16 %v126, %v124
  %v145 = vpack.c.b16 %v127, %v125
  %v146 = vpack.c.b16 %v130, %v128
  %v147 = vpack.c.b16 %v131, %v129
  %v196 = vunpack.c.l.b16 %v45
  %v197 = vunpack.c.l.b16 %v46
  %v198 = vunpack.c.l.b16 %v47
  %v199 = vunpack.c.l.b16 %v48
  %v200 = vunpack.c.l.b16 %v49
  %v201 = vunpack.c.l.b16 %v50
  %v202 = vunpack.c.l.b16 %v51
  %v203 = vunpack.c.l.b16 %v52
  %v204 = vunpack.c.l.b16 %v53
  %v205 = vunpack.c.l.b16 %v54
  %v206 = vunpack.c.l.b16 %v55
  %v207 = vunpack.c.l.b16 %v56
  %v208 = vunpack.c.l.b16 %v57
  %v209 = vunpack.c.l.b16 %v58
  %v210 = vunpack.c.l.b16 %v59
  %v211 = vunpack.c.l.b16 %v60
  %v212 = vunpack.c.l.b16 %v61
  %v213 = vunpack.c.l.b16 %v62
  %v214 = vunpack.c.l.b16 %v63
  %v215 = vunpack.c.l.b16 %v64
  %v216 = vunpack.c.l.b16 %v65
  %v217 = vunpack.c.l.b16 %v66
  %v218 = vunpack.c.l.b16 %v67
  %v219 = vunpack.c.l.b16 %v68
  %v220 = vunpack.c.l.b16 %v69
  %v221 = vunpack.c.l.b16 %v70
  %v222 = vunpack.c.l.b16 %v71
  %v223 = vunpack.c.l.b16 %v72
  %v224 = vunpack.c.l.b16 %v73
  %v225 = vunpack.c.l.b16 %v74
  %v226 = vunpack.c.l.b16 %v75
  %v227 = vunpack.c.l.b16 %v76
  %v228 = vpack.c.b16 %v197, %v196
  %v229 = vpack.c.b16 %v199, %v198
  %v230 = vpack.c.b16 %v201, %v200
  %v231 = vpack.c.b16 %v203, %v202
  %v232 = vpack.c.b16 %v205, %v204
  %v233 = vpack.c.b16 %v207, %v206
  %v234 = vpack.c.b16 %v209, %v208
  %v235 = vpack.c.b16 %v211, %v210
  %v236 = vpack.c.b16 %v213, %v212
  %v237 = vpack.c.b16 %v215, %v214
  %v238 = vpack.c.b16 %v217, %v216
  %v239 = vpack.c.b16 %v219, %v218
  %v240 = vpack.c.b16 %v221, %v220
  %v241 = vpack.c.b16 %v223, %v222
  %v242 = vpack.c.b16 %v225, %v224
  %v243 = vpack.c.b16 %v227, %v226
  %260 = vmatprep.subr.bf16.mxu0 0
  %261 = vmatpush1.bf16.msra.mxu0 %v235
  %262 = vmatprep.subr.bf16.mxu0 0
  %263 = vmatpush1.bf16.msra.mxu0 %v234
  %264 = vmatprep.subr.bf16.mxu0 0
  %265 = vmatpush1.bf16.msra.mxu0 %v233
  %266 = vmatprep.subr.bf16.mxu0 0
  %267 = vmatpush1.bf16.msra.mxu0 %v232
  %268 = vmatprep.subr.bf16.mxu0 0
  %269 = vmatpush1.bf16.msra.mxu0 %v231
  %270 = vmatprep.subr.bf16.mxu0 0
  %271 = vmatpush1.bf16.msra.mxu0 %v230
  %272 = vmatprep.subr.bf16.mxu0 0
  %273 = vmatpush1.bf16.msra.mxu0 %v229
  %274 = vmatprep.subr.bf16.mxu0 0
  %275 = vmatpush1.bf16.msra.mxu0 %v228
  %276 = vmatprep.subr.bf16.mxu0 0
  %277 = vmatpush2.bf16.msra.mxu0 %v243
  %278 = vmatprep.subr.bf16.mxu0 0
  %279 = vmatpush2.bf16.msra.mxu0 %v242
  %280 = vmatprep.subr.bf16.mxu0 0
  %281 = vmatpush2.bf16.msra.mxu0 %v241
  %282 = vmatprep.subr.bf16.mxu0 0
  %283 = vmatpush2.bf16.msra.mxu0 %v240
  %284 = vmatprep.subr.bf16.mxu0 0
  %285 = vmatpush2.bf16.msra.mxu0 %v239
  %286 = vmatprep.subr.bf16.mxu0 0
  %287 = vmatpush2.bf16.msra.mxu0 %v238
  %288 = vmatprep.subr.bf16.mxu0 0
  %289 = vmatpush2.bf16.msra.mxu0 %v237
  %290 = vmatprep.subr.bf16.mxu0 0
  %291 = vmatpush2.bf16.msra.mxu0 %v236
  %292 = vmatprep.mubr.bf16.mxu0 %v133
  %293 = vmatmul.mubr.bf16.gmra.mxu0 %v132
  %v294 = vpop.f32.mrf.mxu0
  %v295 = vadd.f32 %v82, %v294
  %v296 = vpop.f32.mrf.mxu0
  %v297 = vpop.f32.mrf.mxu0
  %v298 = vadd.f32 %v82, %v297
  %v299 = vpop.f32.mrf.mxu0
  %300 = vmatprep.mubr.bf16.mxu0 %v135
  %301 = vmatmul.mubr.bf16.gmra.mxu0 %v134
  %v302 = vpop.f32.mrf.mxu0
  %v303 = vadd.f32 %v82, %v302
  %v304 = vpop.f32.mrf.mxu0
  %v305 = vpop.f32.mrf.mxu0
  %v306 = vadd.f32 %v82, %v305
  %v307 = vpop.f32.mrf.mxu0
  %308 = vmatprep.mubr.bf16.mxu0 %v137
  %309 = vmatmul.mubr.bf16.gmra.mxu0 %v136
  %v310 = vpop.f32.mrf.mxu0
  %v311 = vadd.f32 %v82, %v310
  %v312 = vpop.f32.mrf.mxu0
  %v313 = vpop.f32.mrf.mxu0
  %v314 = vadd.f32 %v82, %v313
  %v315 = vpop.f32.mrf.mxu0
  %316 = vmatprep.mubr.bf16.mxu0 %v139
  %317 = vmatmul.mubr.bf16.gmra.mxu0 %v138
  %v318 = vpop.f32.mrf.mxu0
  %v319 = vadd.f32 %v82, %v318
  %v320 = vpop.f32.mrf.mxu0
  %v321 = vpop.f32.mrf.mxu0
  %v322 = vadd.f32 %v82, %v321
  %v323 = vpop.f32.mrf.mxu0
  %324 = vmatprep.mubr.bf16.mxu0 %v141
  %325 = vmatmul.mubr.bf16.gmra.mxu0 %v140
  %v326 = vpop.f32.mrf.mxu0
  %v327 = vadd.f32 %v82, %v326
  %v328 = vpop.f32.mrf.mxu0
  %v329 = vpop.f32.mrf.mxu0
  %v330 = vadd.f32 %v82, %v329
  %v331 = vpop.f32.mrf.mxu0
  %332 = vmatprep.mubr.bf16.mxu0 %v143
  %333 = vmatmul.mubr.bf16.gmra.mxu0 %v142
  %v334 = vpop.f32.mrf.mxu0
  %v335 = vadd.f32 %v82, %v334
  %v336 = vpop.f32.mrf.mxu0
  %v337 = vpop.f32.mrf.mxu0
  %v338 = vadd.f32 %v82, %v337
  %v339 = vpop.f32.mrf.mxu0
  %340 = vmatprep.mubr.bf16.mxu0 %v145
  %341 = vmatmul.mubr.bf16.gmra.mxu0 %v144
  %v342 = vpop.f32.mrf.mxu0
  %v343 = vadd.f32 %v82, %v342
  %v344 = vpop.f32.mrf.mxu0
  %v345 = vpop.f32.mrf.mxu0
  %v346 = vadd.f32 %v82, %v345
  %v347 = vpop.f32.mrf.mxu0
  %348 = vmatprep.mubr.bf16.mxu0 %v147
  %349 = vmatmul.mubr.bf16.gmra.mxu0 %v146
  %v350 = vpop.f32.mrf.mxu0
  %v351 = vadd.f32 %v82, %v350
  %v352 = vpop.f32.mrf.mxu0
  %v353 = vpop.f32.mrf.mxu0
  %v354 = vadd.f32 %v82, %v353
  %v355 = vpop.f32.mrf.mxu0
  %356 = vdwg.mxu0
  %vm357 = vcmp.gt.f32.partialorder %v295, 0.0
  %vm358 = vcmp.gt.f32.partialorder %v298, 0.0
  %vm359 = vcmp.gt.f32.partialorder %v303, 0.0
  %vm360 = vcmp.gt.f32.partialorder %v306, 0.0
  %vm361 = vcmp.gt.f32.partialorder %v311, 0.0
  %vm362 = vcmp.gt.f32.partialorder %v314, 0.0
  %vm363 = vcmp.gt.f32.partialorder %v319, 0.0
  %vm364 = vcmp.gt.f32.partialorder %v322, 0.0
  %vm365 = vcmp.gt.f32.partialorder %v327, 0.0
  %vm366 = vcmp.gt.f32.partialorder %v330, 0.0
  %vm367 = vcmp.gt.f32.partialorder %v335, 0.0
  %vm368 = vcmp.gt.f32.partialorder %v338, 0.0
  %vm369 = vcmp.gt.f32.partialorder %v343, 0.0
  %vm370 = vcmp.gt.f32.partialorder %v346, 0.0
  %vm371 = vcmp.gt.f32.partialorder %v351, 0.0
  %vm372 = vcmp.gt.f32.partialorder %v354, 0.0
  %v373 = vmul.f32 %v295, 0.1
  %v374 = vmul.f32 %v298, 0.1
  %v375 = vmul.f32 %v303, 0.1
  %v376 = vmul.f32 %v306, 0.1
  %v377 = vmul.f32 %v311, 0.1
  %v378 = vmul.f32 %v314, 0.1
  %v379 = vmul.f32 %v319, 0.1
  %v380 = vmul.f32 %v322, 0.1
  %v381 = vmul.f32 %v327, 0.1
  %v382 = vmul.f32 %v330, 0.1
  %v383 = vmul.f32 %v335, 0.1
  %v384 = vmul.f32 %v338, 0.1
  %v385 = vmul.f32 %v343, 0.1
  %v386 = vmul.f32 %v346, 0.1
  %v387 = vmul.f32 %v351, 0.1
  %v388 = vmul.f32 %v354, 0.1
  %v389 = vsel %vm357, %v295, %v373
  %v390 = vsel %vm358, %v298, %v374
  %v391 = vsel %vm359, %v303, %v375
  %v392 = vsel %vm360, %v306, %v376
  %v393 = vsel %vm361, %v311, %v377
  %v394 = vsel %vm362, %v314, %v378
  %v395 = vsel %vm363, %v319, %v379
  %v396 = vsel %vm364, %v322, %v380
  %v397 = vsel %vm365, %v327, %v381
  %v398 = vsel %vm366, %v330, %v382
  %v399 = vsel %vm367, %v335, %v383
  %v400 = vsel %vm368, %v338, %v384
  %v401 = vsel %vm369, %v343, %v385
  %v402 = vsel %vm370, %v346, %v386
  %v403 = vsel %vm371, %v351, %v387
  %v404 = vsel %vm372, %v354, %v388
  %v405 = vpack.c.bf16 %v390, %v389
  %v406 = vpack.c.bf16 %v392, %v391
  %v407 = vpack.c.bf16 %v394, %v393
  %v408 = vpack.c.bf16 %v396, %v395
  %v409 = vpack.c.bf16 %v398, %v397
  %v410 = vpack.c.bf16 %v400, %v399
  %v411 = vpack.c.bf16 %v402, %v401
  %v412 = vpack.c.bf16 %v404, %v403
  %v413 = vld [vmem:[%s3] sm:$0xf]
  %v414 = vld [vmem:[%s3 + $0x4] sm:$0xf]
  %v415 = vld [vmem:[%s3 + $0x8] sm:$0xf]
  %v416 = vld [vmem:[%s3 + $0xc] sm:$0xf]
  %v417 = vld [vmem:[%s3 + $0x10] sm:$0xf]
  %v418 = vld [vmem:[%s3 + $0x14] sm:$0xf]
  %v419 = vld [vmem:[%s3 + $0x18] sm:$0xf]
  %v420 = vld [vmem:[%s3 + $0x1c] sm:$0xf]
  %v421 = vld [vmem:[%s3 + $0x20] sm:$0xf]
  %v422 = vld [vmem:[%s3 + $0x24] sm:$0xf]
  %v423 = vld [vmem:[%s3 + $0x28] sm:$0xf]
  %v424 = vld [vmem:[%s3 + $0x2c] sm:$0xf]
  %v425 = vld [vmem:[%s3 + $0x30] sm:$0xf]
  %v426 = vld [vmem:[%s3 + $0x34] sm:$0xf]
  %v427 = vld [vmem:[%s3 + $0x38] sm:$0xf]
  %v428 = vld [vmem:[%s3 + $0x3c] sm:$0xf]
  %v429 = vld [vmem:[%s4] sm:$0x1]
  %v431 = vlaneseq
  %v432 = vshrl.u32 %v431, 7
  %v433 = vsub.s32 0, %v432
  %v434 = vrot.slane %v429, %v433
  %v452 = vunpack.c.l.b16 %v413
  %v453 = vunpack.c.l.b16 %v414
  %v454 = vunpack.c.l.b16 %v415
  %v455 = vunpack.c.l.b16 %v416
  %v456 = vunpack.c.l.b16 %v417
  %v457 = vunpack.c.l.b16 %v418
  %v458 = vunpack.c.l.b16 %v419
  %v459 = vunpack.c.l.b16 %v420
  %v460 = vunpack.c.l.b16 %v421
  %v461 = vunpack.c.l.b16 %v422
  %v462 = vunpack.c.l.b16 %v423
  %v463 = vunpack.c.l.b16 %v424
  %v464 = vunpack.c.l.b16 %v425
  %v465 = vunpack.c.l.b16 %v426
  %v466 = vunpack.c.l.b16 %v427
  %v467 = vunpack.c.l.b16 %v428
  %v468 = vpack.c.b16 %v453, %v452
  %v469 = vpack.c.b16 %v455, %v454
  %v470 = vpack.c.b16 %v457, %v456
  %v471 = vpack.c.b16 %v459, %v458
  %v472 = vpack.c.b16 %v461, %v460
  %v473 = vpack.c.b16 %v463, %v462
  %v474 = vpack.c.b16 %v465, %v464
  %v475 = vpack.c.b16 %v467, %v466
  %484 = vmatprep.subr.bf16.mxu0 0
  %485 = vmatpush1.bf16.msra.mxu0 %v475
  %486 = vmatprep.subr.bf16.mxu0 0
  %487 = vmatpush1.bf16.msra.mxu0 %v474
  %488 = vmatprep.subr.bf16.mxu0 0
  %489 = vmatpush1.bf16.msra.mxu0 %v473
  %490 = vmatprep.subr.bf16.mxu0 0
  %491 = vmatpush1.bf16.msra.mxu0 %v472
  %492 = vmatprep.subr.bf16.mxu0 0
  %493 = vmatpush1.bf16.msra.mxu0 %v471
  %494 = vmatprep.subr.bf16.mxu0 0
  %495 = vmatpush1.bf16.msra.mxu0 %v470
  %496 = vmatprep.subr.bf16.mxu0 0
  %497 = vmatpush1.bf16.msra.mxu0 %v469
  %498 = vmatprep.subr.bf16.mxu0 0
  %499 = vmatpush1.bf16.msra.mxu0 %v468
  %500 = vmatprep.subr.bf16.mxu0 0
  %501 = vmatpush2.bf16.msra.mxu0 0
  %502 = vmatprep.subr.bf16.mxu0 0
  %503 = vmatpush2.bf16.msra.mxu0 0
  %504 = vmatprep.subr.bf16.mxu0 0
  %505 = vmatpush2.bf16.msra.mxu0 0
  %506 = vmatprep.subr.bf16.mxu0 0
  %507 = vmatpush2.bf16.msra.mxu0 0
  %508 = vmatprep.subr.bf16.mxu0 0
  %509 = vmatpush2.bf16.msra.mxu0 0
  %510 = vmatprep.subr.bf16.mxu0 0
  %511 = vmatpush2.bf16.msra.mxu0 0
  %512 = vmatprep.subr.bf16.mxu0 0
  %513 = vmatpush2.bf16.msra.mxu0 0
  %514 = vmatprep.subr.bf16.mxu0 0
  %515 = vmatpush2.bf16.msra.mxu0 0
  %516 = vmatprep.mubr.bf16.mxu0 0
  %517 = vmatmul.mubr.bf16.gmra.mxu0 %v405
  %v518 = vpop.f32.mrf.mxu0
  %v519 = vadd.f32 %v434, %v518
  %v520 = vpop.f32.mrf.mxu0
  %v521 = vpop.f32.mrf.mxu0
  %v522 = vadd.f32 %v434, %v521
  %v523 = vpop.f32.mrf.mxu0
  %524 = vmatprep.mubr.bf16.mxu0 0
  %525 = vmatmul.mubr.bf16.gmra.mxu0 %v406
  %v526 = vpop.f32.mrf.mxu0
  %v527 = vadd.f32 %v434, %v526
  %v528 = vpop.f32.mrf.mxu0
  %v529 = vpop.f32.mrf.mxu0
  %v530 = vadd.f32 %v434, %v529
  %v531 = vpop.f32.mrf.mxu0
  %532 = vmatprep.mubr.bf16.mxu0 0
  %533 = vmatmul.mubr.bf16.gmra.mxu0 %v407
  %v534 = vpop.f32.mrf.mxu0
  %v535 = vadd.f32 %v434, %v534
  %v536 = vpop.f32.mrf.mxu0
  %v537 = vpop.f32.mrf.mxu0
  %v538 = vadd.f32 %v434, %v537
  %v539 = vpop.f32.mrf.mxu0
  %540 = vmatprep.mubr.bf16.mxu0 0
  %541 = vmatmul.mubr.bf16.gmra.mxu0 %v408
  %v542 = vpop.f32.mrf.mxu0
  %v543 = vadd.f32 %v434, %v542
  %v544 = vpop.f32.mrf.mxu0
  %v545 = vpop.f32.mrf.mxu0
  %v546 = vadd.f32 %v434, %v545
  %v547 = vpop.f32.mrf.mxu0
  %548 = vmatprep.mubr.bf16.mxu0 0
  %549 = vmatmul.mubr.bf16.gmra.mxu0 %v409
  %v550 = vpop.f32.mrf.mxu0
  %v551 = vadd.f32 %v434, %v550
  %v552 = vpop.f32.mrf.mxu0
  %v553 = vpop.f32.mrf.mxu0
  %v554 = vadd.f32 %v434, %v553
  %v555 = vpop.f32.mrf.mxu0
  %556 = vmatprep.mubr.bf16.mxu0 0
  %557 = vmatmul.mubr.bf16.gmra.mxu0 %v410
  %v558 = vpop.f32.mrf.mxu0
  %v559 = vadd.f32 %v434, %v558
  %v560 = vpop.f32.mrf.mxu0
  %v561 = vpop.f32.mrf.mxu0
  %v562 = vadd.f32 %v434, %v561
  %v563 = vpop.f32.mrf.mxu0
  %564 = vmatprep.mubr.bf16.mxu0 0
  %565 = vmatmul.mubr.bf16.gmra.mxu0 %v411
  %v566 = vpop.f32.mrf.mxu0
  %v567 = vadd.f32 %v434, %v566
  %v568 = vpop.f32.mrf.mxu0
  %v569 = vpop.f32.mrf.mxu0
  %v570 = vadd.f32 %v434, %v569
  %v571 = vpop.f32.mrf.mxu0
  %572 = vmatprep.mubr.bf16.mxu0 0
  %573 = vmatmul.mubr.bf16.gmra.mxu0 %v412
  %v574 = vpop.f32.mrf.mxu0
  %v575 = vadd.f32 %v434, %v574
  %v576 = vpop.f32.mrf.mxu0
  %v577 = vpop.f32.mrf.mxu0
  %v578 = vadd.f32 %v434, %v577
  %v579 = vpop.f32.mrf.mxu0
  %580 = vdwg.mxu0
  %vm581 = vcmp.gt.f32.partialorder %v519, 0.0
  %vm582 = vcmp.gt.f32.partialorder %v522, 0.0
  %vm583 = vcmp.gt.f32.partialorder %v527, 0.0
  %vm584 = vcmp.gt.f32.partialorder %v530, 0.0
  %vm585 = vcmp.gt.f32.partialorder %v535, 0.0
  %vm586 = vcmp.gt.f32.partialorder %v538, 0.0
  %vm587 = vcmp.gt.f32.partialorder %v543, 0.0
  %vm588 = vcmp.gt.f32.partialorder %v546, 0.0
  %vm589 = vcmp.gt.f32.partialorder %v551, 0.0
  %vm590 = vcmp.gt.f32.partialorder %v554, 0.0
  %vm591 = vcmp.gt.f32.partialorder %v559, 0.0
  %vm592 = vcmp.gt.f32.partialorder %v562, 0.0
  %vm593 = vcmp.gt.f32.partialorder %v567, 0.0
  %vm594 = vcmp.gt.f32.partialorder %v570, 0.0
  %vm595 = vcmp.gt.f32.partialorder %v575, 0.0
  %vm596 = vcmp.gt.f32.partialorder %v578, 0.0
  %v597 = vmul.f32 %v519, 0.1
  %v598 = vmul.f32 %v522, 0.1
  %v599 = vmul.f32 %v527, 0.1
  %v600 = vmul.f32 %v530, 0.1
  %v601 = vmul.f32 %v535, 0.1
  %v602 = vmul.f32 %v538, 0.1
  %v603 = vmul.f32 %v543, 0.1
  %v604 = vmul.f32 %v546, 0.1
  %v605 = vmul.f32 %v551, 0.1
  %v606 = vmul.f32 %v554, 0.1
  %v607 = vmul.f32 %v559, 0.1
  %v608 = vmul.f32 %v562, 0.1
  %v609 = vmul.f32 %v567, 0.1
  %v610 = vmul.f32 %v570, 0.1
  %v611 = vmul.f32 %v575, 0.1
  %v612 = vmul.f32 %v578, 0.1
  %v613 = vsel %vm581, %v519, %v597
  %v614 = vsel %vm582, %v522, %v598
  %v615 = vsel %vm583, %v527, %v599
  %v616 = vsel %vm584, %v530, %v600
  %v617 = vsel %vm585, %v535, %v601
  %v618 = vsel %vm586, %v538, %v602
  %v619 = vsel %vm587, %v543, %v603
  %v620 = vsel %vm588, %v546, %v604
  %v621 = vsel %vm589, %v551, %v605
  %v622 = vsel %vm590, %v554, %v606
  %v623 = vsel %vm591, %v559, %v607
  %v624 = vsel %vm592, %v562, %v608
  %v625 = vsel %vm593, %v567, %v609
  %v626 = vsel %vm594, %v570, %v610
  %v627 = vsel %vm595, %v575, %v611
  %v628 = vsel %vm596, %v578, %v612
  %v629 = vld [vmem:[%s5] sm:$0x1]
  %v630 = vpack.c.bf16 %v614, %v613
  %v631 = vpack.c.bf16 %v616, %v615
  %v632 = vpack.c.bf16 %v618, %v617
  %v633 = vpack.c.bf16 %v620, %v619
  %v634 = vpack.c.bf16 %v622, %v621
  %v635 = vpack.c.bf16 %v624, %v623
  %v636 = vpack.c.bf16 %v626, %v625
  %v637 = vpack.c.bf16 %v628, %v627
  %v638 = vld [vmem:[#allocation2] sm:$0x1]
  %640 = vset.pattern.permute.xlu0 0
  %641 = vperm.xlu0 %640, %v638
  %v642 = vpop.permute.xlu0 %641
  %v644 = vlaneseq
  %v645 = vshrl.u32 %v644, 7
  %v646 = vsub.s32 0, %v645
  %v647 = vrot.slane %v642, %v646
  %648 = vmatprep.subr.bf16.mxu0 0
  %649 = vmatpush1.bf16.xpose.msra.mxu0 %v637
  %650 = vmatprep.subr.bf16.mxu0 0
  %651 = vmatpush1.bf16.xpose.msra.mxu0 %v636
  %652 = vmatprep.subr.bf16.mxu0 0
  %653 = vmatpush1.bf16.xpose.msra.mxu0 %v635
  %654 = vmatprep.subr.bf16.mxu0 0
  %655 = vmatpush1.bf16.xpose.msra.mxu0 %v634
  %656 = vmatprep.subr.bf16.mxu0 0
  %657 = vmatpush1.bf16.xpose.msra.mxu0 %v633
  %658 = vmatprep.subr.bf16.mxu0 0
  %659 = vmatpush1.bf16.xpose.msra.mxu0 %v632
  %660 = vmatprep.subr.bf16.mxu0 0
  %661 = vmatpush1.bf16.xpose.msra.mxu0 %v631
  %662 = vmatprep.subr.bf16.mxu0 0
  %663 = vmatpush1.bf16.xpose.msra.mxu0 %v630
  %664 = vmatprep.subr.bf16.mxu0 0
  %665 = vmatpush2.bf16.xpose.msra.mxu0 0
  %666 = vmatprep.subr.bf16.mxu0 0
  %667 = vmatpush2.bf16.xpose.msra.mxu0 0
  %668 = vmatprep.subr.bf16.mxu0 0
  %669 = vmatpush2.bf16.xpose.msra.mxu0 0
  %670 = vmatprep.subr.bf16.mxu0 0
  %671 = vmatpush2.bf16.xpose.msra.mxu0 0
  %672 = vmatprep.subr.bf16.mxu0 0
  %673 = vmatpush2.bf16.xpose.msra.mxu0 0
  %674 = vmatprep.subr.bf16.mxu0 0
  %675 = vmatpush2.bf16.xpose.msra.mxu0 0
  %676 = vmatprep.subr.bf16.mxu0 0
  %677 = vmatpush2.bf16.xpose.msra.mxu0 0
  %678 = vmatprep.subr.bf16.mxu0 0
  %679 = vmatpush2.bf16.xpose.msra.mxu0 0
  %680 = vmatprep.mubr.bf16.mxu0 0
  %681 = vmatmul.mubr.bf16.gmra.mxu0 %v629
  %v682 = vpop.f32.mrf.mxu0
  %v683 = vadd.f32 %v647, %v682
  %v684 = vpop.f32.mrf.mxu0
  %v685 = vpop.f32.mrf.mxu0
  %v686 = vpop.f32.mrf.mxu0
  %687 = vdwg.mxu0
  %688 = vst [vmem:[%s7] sm:$0x1] %v683
  // Predicated region
  $region30: #{critic_forward.1} parent=0 // pred_check
    _
  $region31: #{critic_forward.1} parent=0 // pred_check_branch
    %690 = sbr.rel (0) target = $region33
  $region32: #{critic_forward.1} parent=0 // pred_region
    _
  $region33: #{critic_forward.1} parent=0 // pred_fallthru
    _
  // Predicated region
  $region34: #{critic_forward.1} parent=0 // pred_check
    _
  $region35: #{critic_forward.1} parent=0 // pred_check_branch
    %692 = sbr.rel (0) target = $region37
  $region36: #{critic_forward.1} parent=0 // pred_region
    _
  $region37: #{critic_forward.1} parent=0 // pred_fallthru
    _

</llo_original>
